<compile_context>
chip_gen: v7x
topology: tpu7x:2x2x1
jax: 0.10.0
libtpu: 0.0.40
codegen_flags: <defaults>
</compile_context>

<pallas_src>
import jax
import jax.numpy as jnp
from jax.experimental import pallas as pl
from jax.experimental.pallas import tpu as pltpu


# ----------------------------------------------------------------------------
# VMEM budget / tile selection
# ----------------------------------------------------------------------------
def _vmem_limit_bytes():
    """Chip-aware scoped-VMEM limit: ~70% of physical, capped at 96 MiB.

    -> ~45 MiB on v7x (64 MiB physical), ~90 MiB on v5e/v6e (128 MiB).
    """
    cap = 128 * 1024 * 1024
    try:
        cap = int(pltpu.get_tpu_info().vmem_capacity_bytes)
    except Exception:
        pass
    return min(96 * 1024 * 1024, int(cap * 0.7))


def _pick_row_block(bc, n, vmem_budget, *, full_width_streams=2, target=256):
    """Largest sublane-friendly row tile that fits the VMEM budget.

    Sizes for the worst-case pass (kernel 2: x in + out, both double-buffered),
    using a 4-byte/elem upper bound.  Never falls back to rb = BC.
    """
    if bc < 8:
        return bc  # full-dim block is the only legal sub-8 option
    bytes_per_row = full_width_streams * 2 * n * 4
    rb = vmem_budget // max(1, bytes_per_row)
    rb = min(rb, target)
    rb = (rb // 8) * 8
    rb = max(rb, 8)
    rb = min(rb, ((bc + 7) // 8) * 8)  # no point exceeding BC (rounded to 8)
    # v7x has 2 TensorCores: prefer >= 2 grid steps on the "parallel" axis.
    while rb > 8 and ((bc + rb - 1) // rb) < 2:
        rb = max(8, ((rb // 2) // 8) * 8)
    return rb


# ----------------------------------------------------------------------------
# Kernels
# ----------------------------------------------------------------------------
def _stats_kernel(x_ref, stats_ref):
    """Per-row spatial mean + unbiased variance, one shifted pass.

    x_ref: (rb, N) in native dtype; stats_ref: (rb, 2) f32 = [mean, var].
    """
    xf = x_ref[...].astype(jnp.float32)
    n = xf.shape[-1]
    shift = xf[:, 0:1]                       # per-row shift: kills cancellation
    d = xf - shift
    s = jnp.sum(d, axis=-1, keepdims=True)
    ss = jnp.sum(d * d, axis=-1, keepdims=True)
    mean = shift + s * (1.0 / n)
    inv_nm1 = (1.0 / (n - 1)) if n > 1 else float("nan")  # torch unbiased var
    var = (ss - s * s * (1.0 / n)) * inv_nm1
    var = jnp.maximum(var, 0.0)              # guard tiny negative rounding
    stats_ref[...] = jnp.concatenate([mean, var], axis=-1)


def _make_apply_kernel(rb):
    """Streaming fused affine:  out = x * gain + bias  (per-row scalars)."""

    def _apply_kernel(x_ref, scal_ref, o_ref):
        start = pl.program_id(0) * rb
        if rb % 8 == 0:
            start = pl.multiple_of(start, 8)
        sb = scal_ref[pl.ds(start, rb), :]   # resident (BC_pad, 2) -> (rb, 2)
        gain = sb[:, 0:1]
        bias = sb[:, 1:2]
        xf = x_ref[...].astype(jnp.float32)
        o_ref[...] = (xf * gain + bias).astype(o_ref.dtype)

    return _apply_kernel


# ----------------------------------------------------------------------------
# RNG (distributional analogue of the torch module's sampling)
# ----------------------------------------------------------------------------
def sample_randoms(key, B, C):
    k1, k2, k3, k4, k5 = jax.random.split(key, 5)
    return {
        "eps_mu": jax.random.normal(k1, (B, C), dtype=jnp.float32),
        "eps_sig": jax.random.normal(k2, (B, C), dtype=jnp.float32),
        "perm1": jax.random.permutation(k3, B),
        "perm2": jax.random.permutation(k4, B),
        "lmda": jax.random.dirichlet(
            k5, jnp.array([0.1, 0.1, 0.1], jnp.float32), shape=(B,)
        ),  # (B, 3)
    }


# ----------------------------------------------------------------------------
# Wrapper: active forward path of DirBatchStyle (type='dir_bat')
# ----------------------------------------------------------------------------
def dir_batch_style_pallas(x, rnd, eps=1e-6, z=0.9):
    B, C, W, H = x.shape
    N = W * H
    BC = B * C
    x2 = x.reshape(BC, N)                    # native dtype; cast happens in-kernel

    vmem_limit = _vmem_limit_bytes()
    rb = _pick_row_block(BC, N, vmem_limit // 2)   # headroom for scalars/scratch
    nblk = (BC + rb - 1) // rb
    grid = (nblk,)

    row_spec = pl.BlockSpec((rb, N), lambda i: (i, 0))   # lane-dense (full N)
    stat_spec = pl.BlockSpec((rb, 2), lambda i: (i, 0))

    cparams = pltpu.CompilerParams(
        dimension_semantics=("parallel",),
        vmem_limit_bytes=vmem_limit,
    )

    # ---- kernel 1: per-(b,c) spatial statistics --------------------------
    stats = pl.pallas_call(
        _stats_kernel,
        out_shape=jax.ShapeDtypeStruct((BC, 2), jnp.float32),
        grid_spec=pltpu.PrefetchScalarGridSpec(
            num_scalar_prefetch=0,
            grid=grid,
            in_specs=[row_spec],
            out_specs=stat_spec,
        ),
        compiler_params=cparams,
    )(x2)

    # ---- tiny per-(B,C) glue: sampling + Dirichlet mixing -----------------
    mu = stats[:, 0].reshape(B, C)
    var = stats[:, 1].reshape(B, C)
    sig = jnp.sqrt(var + eps)                # (var + eps).sqrt()
    std1 = jnp.sqrt(var)                     # x.std() — unbiased, no eps

    mu_mu = mu.mean(axis=0)
    mu_std = jnp.std(mu, axis=0, ddof=1)
    std_mu = std1.mean(axis=0)
    std_std = jnp.std(std1, axis=0, ddof=1)

    mu_b = mu_mu + mu_std * rnd["eps_mu"]    # Normal(mu_mu, mu_std).sample([B])
    sig_b = std_mu + std_std * rnd["eps_sig"]

    mu2, sig2 = mu[rnd["perm1"]], sig[rnd["perm1"]]
    mu3, sig3 = mu[rnd["perm2"]], sig[rnd["perm2"]]

    l = rnd["lmda"]                          # (B, 3), per-batch Dirichlet weights
    l0, l1, l2 = l[:, 0:1], l[:, 1:2], l[:, 2:3]
    mu_mix = mu * l0 + mu2 * l1 + mu3 * l2
    sig_mix = sig * l0 + sig2 * l1 + sig3 * l2
    sig_mix_f = z * sig_mix + (1.0 - z) * sig_b
    mu_mix_f = z * mu_mix + (1.0 - z) * mu_b

    gain = sig_mix_f / sig                   # fold 1/sig into the scale
    bias = mu_mix_f - mu * gain              # fold mu into the bias
    scal = jnp.stack(
        [gain.reshape(BC), bias.reshape(BC)], axis=-1
    ).astype(jnp.float32)                    # (BC, 2)
    bc_pad = nblk * rb
    if bc_pad != BC:
        scal = jnp.pad(scal, ((0, bc_pad - BC), (0, 0)))

    # Resident across all grid steps (constant index_map, full-array block).
    scal_spec = pl.BlockSpec((bc_pad, 2), lambda i: (0, 0))

    # ---- kernel 2: streaming fused affine  out = x*gain + bias -----------
    out2 = pl.pallas_call(
        _make_apply_kernel(rb),
        out_shape=jax.ShapeDtypeStruct((BC, N), x.dtype),
        grid_spec=pltpu.PrefetchScalarGridSpec(
            num_scalar_prefetch=0,
            grid=grid,
            in_specs=[row_spec, scal_spec],
            out_specs=row_spec,
        ),
        compiler_params=cparams,
    )(x2, scal)

    return out2.reshape(B, C, W, H)


# ----------------------------------------------------------------------------
# Pure-JAX reference (mirrors the PyTorch 'dir_bat' branch)
# ----------------------------------------------------------------------------
def dir_batch_style_reference(x, rnd, eps=1e-6, z=0.9):
    B, C, W, H = x.shape
    xf = x.astype(jnp.float32)
    mu = xf.mean(axis=(2, 3), keepdims=True)
    var = jnp.var(xf, axis=(2, 3), keepdims=True, ddof=1)
    sig = jnp.sqrt(var + eps)
    x_normed = (xf - mu) / sig
    std_1 = jnp.sqrt(var)
    mu_mu = mu.mean(axis=0).reshape(C)
    mu_std = jnp.std(mu, axis=0, ddof=1).reshape(C)
    std_mu = std_1.mean(axis=0).reshape(C)
    std_std = jnp.std(std_1, axis=0, ddof=1).reshape(C)
    mu_b = (mu_mu + mu_std * rnd["eps_mu"]).reshape(B, C, 1, 1)
    sig_b = (std_mu + std_std * rnd["eps_sig"]).reshape(B, C, 1, 1)
    mu2, sig2 = mu[rnd["perm1"]], sig[rnd["perm1"]]
    mu3, sig3 = mu[rnd["perm2"]], sig[rnd["perm2"]]
    l = rnd["lmda"]
    l0 = l[:, 0].reshape(B, 1, 1, 1)
    l1 = l[:, 1].reshape(B, 1, 1, 1)
    l2 = l[:, 2].reshape(B, 1, 1, 1)
    mu_mix = mu * l0 + mu2 * l1 + mu3 * l2
    sig_mix = sig * l0 + sig2 * l1 + sig3 * l2
    sig_mix_f = z * sig_mix + (1.0 - z) * sig_b
    mu_mix_f = z * mu_mix + (1.0 - z) * mu_b
    return (x_normed * sig_mix_f + mu_mix_f).astype(x.dtype)


if __name__ == "__main__":
    key = jax.random.PRNGKey(0)
    k_x, k_rnd = jax.random.split(key)

    B, C, W, H = 2, 4, 16, 16
    x = jax.random.normal(k_x, (B, C, W, H), dtype=jnp.float32)
    rnd = sample_randoms(k_rnd, B, C)

    out = dir_batch_style_pallas(x, rnd)
    out = jax.block_until_ready(out)

    ref = dir_batch_style_reference(x, rnd)

    assert out.shape == (B, C, W, H) and out.dtype == x.dtype
    assert jnp.allclose(out, ref, atol=1e-4, rtol=1e-4), "mismatch vs reference"

    print("KERNEL_OK")
</pallas_src>

<mosaic_0001>
module attributes {stable_mosaic.version = 11 : i64} {
  func.func @_stats_kernel(%arg0: i32, %arg1: memref<8x256xf32, #tpu.memory_space<vmem>>, %arg2: memref<8x2xf32, #tpu.memory_space<vmem>>) attributes {dimension_semantics = [#tpu.dimension_semantics<parallel>], iteration_bounds = array<i64: 1>, scalar_prefetch = 0 : i64, scratch_operands = 0 : i64, tpu.core_type = #tpu.core_type<tc>, window_params = [{transform_indices = @transform_0, window_bounds = array<i64: 8, 256>}, {transform_indices = @transform_1, window_bounds = array<i64: 8, 2>}]} {
    %c0 = arith.constant 0 : index
    %c0_0 = arith.constant 0 : index
    %0 = vector.load %arg1[%c0, %c0_0] : memref<8x256xf32, #tpu.memory_space<vmem>>, vector<8x256xf32>
    %1 = vector.extract_strided_slice %0 {offsets = [0, 0], sizes = [8, 1], strides = [1, 1]} : vector<8x256xf32> to vector<8x1xf32>
    %2 = vector.broadcast %1 : vector<8x1xf32> to vector<8x256xf32>
    %3 = arith.subf %0, %2 : vector<8x256xf32>
    %cst = arith.constant dense<0.000000e+00> : vector<8xf32>
    %4 = vector.multi_reduction <add>, %3, %cst [1] : vector<8x256xf32> to vector<8xf32>
    %5 = vector.shape_cast %4 : vector<8xf32> to vector<8x1xf32>
    %6 = arith.mulf %3, %3 : vector<8x256xf32>
    %cst_1 = arith.constant dense<0.000000e+00> : vector<8xf32>
    %7 = vector.multi_reduction <add>, %6, %cst_1 [1] : vector<8x256xf32> to vector<8xf32>
    %8 = vector.shape_cast %7 : vector<8xf32> to vector<8x1xf32>
    %cst_2 = arith.constant 3.906250e-03 : f32
    %9 = vector.broadcast %cst_2 : f32 to vector<8x1xf32>
    %10 = arith.mulf %5, %9 : vector<8x1xf32>
    %11 = arith.addf %1, %10 : vector<8x1xf32>
    %12 = arith.mulf %5, %5 : vector<8x1xf32>
    %cst_3 = arith.constant 3.906250e-03 : f32
    %13 = vector.broadcast %cst_3 : f32 to vector<8x1xf32>
    %14 = arith.mulf %12, %13 : vector<8x1xf32>
    %15 = arith.subf %8, %14 : vector<8x1xf32>
    %cst_4 = arith.constant 0.00392156886 : f32
    %16 = vector.broadcast %cst_4 : f32 to vector<8x1xf32>
    %17 = arith.mulf %15, %16 : vector<8x1xf32>
    %cst_5 = arith.constant 0.000000e+00 : f32
    %18 = vector.broadcast %cst_5 : f32 to vector<8x1xf32>
    %19 = arith.maximumf %17, %18 : vector<8x1xf32>
    %20 = tpu.concatenate %11, %19 in 1 : vector<8x1xf32>, vector<8x1xf32> -> vector<8x2xf32>
    %c0_6 = arith.constant 0 : index
    %c0_7 = arith.constant 0 : index
    %21 = vector.load %arg2[%c0_6, %c0_7] : memref<8x2xf32, #tpu.memory_space<vmem>>, vector<8x2xf32>
    tpu.vector_store %arg2[%c0_6, %c0_7], %20 {strides = array<i32>} : memref<8x2xf32, #tpu.memory_space<vmem>>, vector<8x2xf32>,
    return
  }
  func.func @transform_0(%arg0: i32) -> (i32, i32) {
    %c0_i32 = arith.constant 0 : i32
    %c0_i32_0 = arith.constant 0 : i32
    return %arg0, %c0_i32 : i32, i32
  }
  func.func @transform_1(%arg0: i32) -> (i32, i32) {
    %c0_i32 = arith.constant 0 : i32
    %c0_i32_0 = arith.constant 0 : i32
    return %arg0, %c0_i32 : i32, i32
  }
}

</mosaic_0001>

<llo_original>
// kernel: tpu_custom_call.1
$region0: #{tpu_custom_call.1}
  #allocation0 [shape = 'u32[]', space=smem, size = 0x4, offset = 0x4, fixed_abs, tag = 'smem constant byte address 0x4 - core index']
  #allocation1 [shape = 'u32[144,128]{1,0:T(1,128)}', space=vmem, size = 0x12000, scoped, tag = 'internal scratch']
  %s0 = inlined_call_operand.hbm [shape: f32[8,256], index: 0, kind: input, shape index: {}]
  %s1 = inlined_call_operand.hbm [shape: f32[8,2], index: 1, kind: output, shape index: {}]
  %s2 = sld [smem:[#allocation0]]
  $region18: #{tpu_custom_call.1} parent=0
    _
  %s4 = ssub.s32 1, %s2
  %s5 = scalar_select 0, %s4, %s2
  $region1: #{tpu_custom_call.1} parent=0
    #allocation2 [shape = 'u8[8192]{0}', space=vmem, size = 0x2000, scoped, tag = 'input window, operand 0, single buffered']
    #allocation3 [shape = 's32[1]{0}', space=sflag, size = 0x4, scoped, tag = 'scoped memory for tpu_custom_call.1']
    #allocation4 [shape = 's32[1]{0}', space=sflag, size = 0x4, scoped, tag = 'scoped memory for tpu_custom_call.1']
    #allocation5 [shape = 'u8[4096]{0}', space=vmem, size = 0x1000, scoped, tag = 'output window, operand 0, single buffered']
    %6 = vsyncpa [#allocation3], 0
    %7 = vsyncpa [#allocation4], 0
    // Predicated region
    $region2: #{tpu_custom_call.1} parent=1 // pred_check
      _
    $region3: #{tpu_custom_call.1} parent=1 // pred_check_branch
      %9 = sbr.rel (0) target = $region5
    $region4: #{tpu_custom_call.1} parent=1 // pred_region
      %s11 = ssub.s32 256, 256
      %12 = vsyncadd [#allocation3], %s11
      %s14 = sshll.u32 [#allocation2], 4
      %s15 = int_to_ptr.vmem [resolvable:$true] %s14
      %17 = dma.hbm_to_vmem [thread:$0]  %s0, 256, %s15, [#allocation3]
    $region5: #{tpu_custom_call.1} parent=1 // pred_fallthru
      _
    // Predicated region
    $region6: #{tpu_custom_call.1} parent=1 // pred_check
      _
    $region7: #{tpu_custom_call.1} parent=1 // pred_check_branch
      %19 = sbr.rel (0) target = $region9
    $region8: #{tpu_custom_call.1} parent=1 // pred_region
      %20 = dma.done [#allocation3], 256
    $region9: #{tpu_custom_call.1} parent=1 // pred_fallthru
      _
    %v21 = vld [vmem:[#allocation2] sm:$0xff]
    %v22 = vld [vmem:[#allocation2 + $0x8] sm:$0xff]
    %24 = vset.pattern.permute.xlu0 0
    %25 = vperm.xlu0 %24, %v21
    %v26 = vpop.permute.xlu0 %25
    %v28 = vsub.f32 %v21, %v26
    %v29 = vsub.f32 %v22, %v26
    %v30 = vadd.f32 %v28, %v29
    %31 = vadd.xlane.f32.xlu0 %v30
    %v32 = vpop.xlane.xlu0 %31
    %v33 = vmul.f32 %v28, %v28
    %v34 = vmul.f32 %v29, %v29
    %v35 = vadd.f32 %v33, %v34
    %36 = vadd.xlane.f32.xlu0 %v35
    %v37 = vpop.xlane.xlu0 %36
    %v38 = vmul.f32 %v32, 0.00390625
    %v39 = vadd.f32 %v21, %v38
    %v40 = vmul.f32 %v32, %v32
    %v41 = vmul.f32 %v40, 0.00390625
    %v42 = vsub.f32 %v37, %v41
    %v43 = vmul.f32 %v42, 0.003921569
    %v44 = vmax.f32 %v43, 0.0
    %vm45 = vcmask 7168
    %v46 = vsel %vm45, %v39, %v44
    %vm47 = vcmask 15360
    %48 = vst.msk [vmem:[#allocation5] sm:$0xff] %vm47, %v46
    // Predicated region
    $region10: #{tpu_custom_call.1} parent=1 // pred_check
      _
    $region11: #{tpu_custom_call.1} parent=1 // pred_check_branch
      %50 = sbr.rel (0) target = $region13
    $region12: #{tpu_custom_call.1} parent=1 // pred_region
      %s52 = ssub.s32 128, 128
      %53 = vsyncadd [#allocation4], %s52
      %s55 = sshll.u32 [#allocation5], 4
      %s56 = int_to_ptr.vmem [resolvable:$true] %s55
      %58 = dma.vmem_to_hbm [thread:$0]  %s56, 128, %s1, [#allocation4]
    $region13: #{tpu_custom_call.1} parent=1 // pred_fallthru
      _
    // Predicated region
    $region14: #{tpu_custom_call.1} parent=1 // pred_check
      _
    $region15: #{tpu_custom_call.1} parent=1 // pred_check_branch
      %60 = sbr.rel (0) target = $region17
    $region16: #{tpu_custom_call.1} parent=1 // pred_region
      %61 = dma.done [#allocation4], 128
    $region17: #{tpu_custom_call.1} parent=1 // pred_fallthru
      _
    %62 = vsyncpa [#allocation3], 1
    %63 = vsyncpa [#allocation4], 1

</llo_original>
